<compile_context>
chip_gen: v6e
topology: v6e:2x2x1
jax: 0.10.0
libtpu: 0.0.40
codegen_flags: <defaults>
</compile_context>

<pallas_src>
import functools

import jax
import jax.numpy as jnp
from jax.experimental import pallas as pl
from jax.experimental.pallas import tpu as pltpu


def _round_up(x, m):
    return ((x + m - 1) // m) * m


def _bf16_exp_default():
    """bf16 EUP exp only on v6e / v7x (v5e and earlier have no bf16 EUP path)."""
    try:
        kind = jax.devices()[0].device_kind.lower()
    except Exception:
        return False
    return ("v6" in kind) or ("v7" in kind)


def _flash_attn_kernel(pq_ref, k_ref, v_ref, qres_ref, gamma_ref, alpha_ref,
                       o_ref, m_sc, l_sc, acc_sc, *,
                       n_keys, block_k, exp_bf16):
    ki = pl.program_id(1)
    nk = pl.num_programs(1)

    @pl.when(ki == 0)
    def _init():
        m_sc[...] = jnp.full_like(m_sc, -jnp.inf)
        l_sc[...] = jnp.zeros_like(l_sc)
        acc_sc[...] = jnp.zeros_like(acc_sc)

    # scores[m, n] = <proj_q[m], proj_k[n]>  (contract hidden dim; no transpose)
    s = jax.lax.dot_general(pq_ref[...], k_ref[...], (((1,), (1,)), ((), ())),
                            preferred_element_type=jnp.float32)        # (tq, tk)

    if n_keys % block_k != 0:
        # Zero-padded key rows exist only in the last key tile; mask them out.
        col = jax.lax.broadcasted_iota(jnp.int32, s.shape, 1) + ki * block_k
        s = jnp.where(col < n_keys, s, -jnp.inf)

    # Online (flash) softmax accumulation; running stats stay f32.
    m_prev = m_sc[...]
    m_new = jnp.maximum(m_prev, jnp.max(s, axis=-1, keepdims=True))
    corr = jnp.exp(m_prev - m_new)
    z = s - m_new
    if exp_bf16:
        p_bf = jnp.exp(z.astype(jnp.bfloat16))       # bf16 EUP path (v6e/v7x)
        p_f32 = p_bf.astype(jnp.float32)
    else:
        p_f32 = jnp.exp(z)                           # f32 path (v5e-safe)
        p_bf = p_f32.astype(jnp.bfloat16)
    l_sc[...] = corr * l_sc[...] + jnp.sum(p_f32, axis=-1, keepdims=True)
    acc_sc[...] = corr * acc_sc[...] + jnp.dot(p_bf, v_ref[...],
                                               preferred_element_type=jnp.float32)
    m_sc[...] = m_new

    @pl.when(ki == nk - 1)
    def _finalize():
        gamma = gamma_ref[0, 0]
        alpha = alpha_ref[0, 0]
        out = acc_sc[...] * pl.reciprocal(l_sc[...], approx=True)
        # residual uses the original f32 q tile (exact when gamma == 0)
        o_ref[...] = (gamma * out + alpha * qres_ref[...]).astype(o_ref.dtype)


def self_attention(x, q, params, *, block_q=256, block_k=512, exp_bf16=None):
    N, F = x.shape
    Nq, Fq = q.shape
    H = params["wq"].shape[1]
    O = params["wv"].shape[1]
    assert Fq == F
    assert O == F, "output_size must equal feature_size (required by the .view in PyTorch)"

    if exp_bf16 is None:
        exp_bf16 = _bf16_exp_default()

    # ---- 1) Projections once, as plain XLA GEMMs (bf16 MXU operands downstream).
    proj_q = (q @ params["wq"] + params["bq"]).astype(jnp.bfloat16)   # (Nq, H)
    proj_k = (x @ params["wk"] + params["bk"]).astype(jnp.bfloat16)   # (N,  H)
    proj_v = (x @ params["wv"] + params["bv"]).astype(jnp.bfloat16)   # (N,  O)

    # ---- 2) Lane-dense padding (feature axes -> multiples of 128).
    Hp = _round_up(H, 128)
    Op = _round_up(O, 128)

    # ---- 3) Tile selection: multiples of 16 (bf16 sublanes); pad row counts.
    tq = _round_up(max(16, min(block_q, _round_up(Nq, 16))), 16)
    tk = _round_up(max(16, min(block_k, _round_up(N, 16))), 16)
    Nq_pad = _round_up(Nq, tq)
    if Nq_pad // tq < 2 and Nq > 16:
        # Give the v7x megacore split at least two query tiles.
        tq = _round_up((Nq + 1) // 2, 16)
        Nq_pad = _round_up(Nq, tq)
    N_pad = _round_up(N, tk)
    grid = (Nq_pad // tq, N_pad // tk)

    def _pad2(a, rows, cols):
        r, c = a.shape
        if r == rows and c == cols:
            return a
        return jnp.pad(a, ((0, rows - r), (0, cols - c)))

    pq_p = _pad2(proj_q, Nq_pad, Hp)                       # (Nq_pad, Hp) bf16
    k_p = _pad2(proj_k, N_pad, Hp)                         # (N_pad,  Hp) bf16
    v_p = _pad2(proj_v, N_pad, Op)                         # (N_pad,  Op) bf16
    q_res = _pad2(q.astype(jnp.float32), Nq_pad, Op)       # (Nq_pad, Op) f32 residual

    gamma = params["gamma"].reshape(1, 1).astype(jnp.float32)
    alpha = params["alpha"].reshape(1, 1).astype(jnp.float32)

    # ---- 4) Explicit VMEM budget (double-buffered tiles + scratch) with headroom.
    tile_bytes = (tq * Hp * 2 + tk * Hp * 2 + tk * Op * 2 + tq * Op * 4   # inputs
                  + tq * Op * 4)                                          # output
    scratch_bytes = tq * Op * 4 + 2 * tq * 128 * 4
    footprint = 2 * tile_bytes + scratch_bytes
    vmem_limit = int(min(128 * 1024 * 1024,
                         max(2 * footprint + (2 << 20), 32 * 1024 * 1024)))

    # ---- 5) Accurate cost estimate (K/V re-read once per query tile).
    grid_q, grid_k = grid
    cost = pl.CostEstimate(
        flops=int(2 * Nq_pad * N_pad * (Hp + Op)),
        transcendentals=int(Nq_pad * N_pad + Nq_pad * grid_k),
        bytes_accessed=int(pq_p.size * 2 + q_res.size * 4
                           + grid_q * (k_p.size * 2 + v_p.size * 2)
                           + Nq_pad * Op * 4),
    )

    smem = pltpu.MemorySpace.SMEM
    kernel = functools.partial(_flash_attn_kernel,
                               n_keys=N, block_k=tk, exp_bf16=bool(exp_bf16))

    out_pad = pl.pallas_call(
        kernel,
        out_shape=jax.ShapeDtypeStruct((Nq_pad, Op), jnp.float32),
        grid_spec=pltpu.PrefetchScalarGridSpec(
            num_scalar_prefetch=0,
            grid=grid,
            in_specs=[
                pl.BlockSpec((tq, Hp), lambda qi, ki: (qi, 0)),   # proj_q (bf16)
                pl.BlockSpec((tk, Hp), lambda qi, ki: (ki, 0)),   # proj_k (bf16)
                pl.BlockSpec((tk, Op), lambda qi, ki: (ki, 0)),   # proj_v (bf16)
                pl.BlockSpec((tq, Op), lambda qi, ki: (qi, 0)),   # q residual (f32)
                pl.BlockSpec((1, 1), lambda qi, ki: (0, 0), memory_space=smem),  # gamma
                pl.BlockSpec((1, 1), lambda qi, ki: (0, 0), memory_space=smem),  # alpha
            ],
            out_specs=pl.BlockSpec((tq, Op), lambda qi, ki: (qi, 0)),  # resident over ki
            scratch_shapes=[
                pltpu.VMEM((tq, 1), jnp.float32),    # running max
                pltpu.VMEM((tq, 1), jnp.float32),    # running denom
                pltpu.VMEM((tq, Op), jnp.float32),   # output accumulator
            ],
        ),
        compiler_params=pltpu.CompilerParams(
            dimension_semantics=("parallel", "arbitrary"),
            vmem_limit_bytes=vmem_limit),
        cost_estimate=cost,
    )(pq_p, k_p, v_p, q_res, gamma, alpha)

    return out_pad[:Nq, :O]


def init_params(key, feature_size, hidden_dim, output_size):
    ks = jax.random.split(key, 6)
    scale = 1.0 / jnp.sqrt(feature_size)
    # Conv1d(k=1) weights stored pre-transposed as (in_channels, out_channels).
    return {
        "wq": jax.random.normal(ks[0], (feature_size, hidden_dim), jnp.float32) * scale,
        "bq": jax.random.normal(ks[1], (1, hidden_dim), jnp.float32) * scale,
        "wk": jax.random.normal(ks[2], (feature_size, hidden_dim), jnp.float32) * scale,
        "bk": jax.random.normal(ks[3], (1, hidden_dim), jnp.float32) * scale,
        "wv": jax.random.normal(ks[4], (feature_size, output_size), jnp.float32) * scale,
        "bv": jax.random.normal(ks[5], (1, output_size), jnp.float32) * scale,
        "gamma": jnp.zeros((1,), jnp.float32),       # nn.Parameter(torch.zeros(1))
        "alpha": jnp.full((1,), 2.0, jnp.float32),   # nn.Parameter(torch.tensor(2.0))
        # gamma_att (= ones(1)) is unused in the PyTorch forward pass.
    }


def ref_forward(x, q, p):
    proj_q = q @ p["wq"] + p["bq"]
    proj_k = x @ p["wk"] + p["bk"]
    proj_v = x @ p["wv"] + p["bv"]
    attn = jax.nn.softmax(proj_q @ proj_k.T, axis=-1)
    out = attn @ proj_v
    return p["gamma"][0] * out + p["alpha"][0] * q


if __name__ == "__main__":
    feature_size, hidden_dim, output_size = 32, 32, 32
    N, Nq = 128, 64

    key = jax.random.PRNGKey(0)
    kx, kq, kp = jax.random.split(key, 3)
    x = jax.random.normal(kx, (N, feature_size), jnp.float32)
    q = jax.random.normal(kq, (Nq, feature_size), jnp.float32)
    params = init_params(kp, feature_size, hidden_dim, output_size)

    # Small tiles so the toy shapes exercise the (query, key) grid: grid = (2, 2).
    # Default init (gamma=0, alpha=2): output is exactly alpha * q in f32.
    out = self_attention(x, q, params, block_q=32, block_k=64)
    jax.block_until_ready(out)
    ref = ref_forward(x, q, params)
    assert out.shape == ref.shape
    assert jnp.allclose(out, ref, atol=1e-5, rtol=1e-5)

    # Non-zero gamma exercises the attention path (bf16 MXU + approx reciprocal).
    params_nz = dict(params, gamma=jnp.full((1,), 0.5, jnp.float32))
    out_nz = self_attention(x, q, params_nz, block_q=32, block_k=64)
    jax.block_until_ready(out_nz)
    assert jnp.allclose(out_nz, ref_forward(x, q, params_nz), atol=5e-2, rtol=5e-2)

    # Non-divisible key count exercises the kernel-side -inf padding mask.
    x2 = jax.random.normal(jax.random.PRNGKey(1), (100, feature_size), jnp.float32)
    out2 = self_attention(x2, q, params_nz, block_q=32, block_k=64)
    jax.block_until_ready(out2)
    assert jnp.allclose(out2, ref_forward(x2, q, params_nz), atol=5e-2, rtol=5e-2)

    print("KERNEL_OK")
</pallas_src>

<mosaic_0001>
module attributes {stable_mosaic.version = 11 : i64} {
  func.func @_flash_attn_kernel(%arg0: i32, %arg1: i32, %arg2: memref<32x128xbf16, #tpu.memory_space<vmem>>, %arg3: memref<64x128xbf16, #tpu.memory_space<vmem>>, %arg4: memref<64x128xbf16, #tpu.memory_space<vmem>>, %arg5: memref<32x128xf32, #tpu.memory_space<vmem>>, %arg6: memref<1x1xf32, #tpu.memory_space<smem>>, %arg7: memref<1x1xf32, #tpu.memory_space<smem>>, %arg8: memref<32x128xf32, #tpu.memory_space<vmem>>, %arg9: memref<32x1xf32, #tpu.memory_space<vmem>>, %arg10: memref<32x1xf32, #tpu.memory_space<vmem>>, %arg11: memref<32x128xf32, #tpu.memory_space<vmem>>) attributes {dimension_semantics = [#tpu.dimension_semantics<parallel>, #tpu.dimension_semantics<arbitrary>], iteration_bounds = array<i64: 2, 2>, scalar_prefetch = 0 : i64, scratch_operands = 3 : i64, tpu.core_type = #tpu.core_type<tc>, window_params = [{transform_indices = @transform_0, window_bounds = array<i64: 32, 128>}, {transform_indices = @transform_1, window_bounds = array<i64: 64, 128>}, {transform_indices = @transform_2, window_bounds = array<i64: 64, 128>}, {transform_indices = @transform_3, window_bounds = array<i64: 32, 128>}, {transform_indices = @transform_4, window_bounds = array<i64: 1, 1>}, {transform_indices = @transform_5, window_bounds = array<i64: 1, 1>}, {transform_indices = @transform_6, window_bounds = array<i64: 32, 128>}]} {
    %c0_i32 = arith.constant 0 : i32
    %0 = arith.cmpi eq, %arg1, %c0_i32 : i32
    %1 = arith.extui %0 : i1 to i32
    %c0_i32_0 = arith.constant 0 : i32
    %2 = arith.cmpi ne, %1, %c0_i32_0 : i32
    scf.if %2 {
      %cst_22 = arith.constant 0xFF800000 : f32
      %33 = vector.broadcast %cst_22 : f32 to vector<32x1xf32>
      %c0_23 = arith.constant 0 : index
      %c0_24 = arith.constant 0 : index
      %34 = vector.load %arg9[%c0_23, %c0_24] : memref<32x1xf32, #tpu.memory_space<vmem>>, vector<32x1xf32>
      tpu.vector_store %arg9[%c0_23, %c0_24], %33 {strides = array<i32>} : memref<32x1xf32, #tpu.memory_space<vmem>>, vector<32x1xf32>,
      %cst_25 = arith.constant 0.000000e+00 : f32
      %35 = vector.broadcast %cst_25 : f32 to vector<32x1xf32>
      %c0_26 = arith.constant 0 : index
      %c0_27 = arith.constant 0 : index
      %36 = vector.load %arg10[%c0_26, %c0_27] : memref<32x1xf32, #tpu.memory_space<vmem>>, vector<32x1xf32>
      tpu.vector_store %arg10[%c0_26, %c0_27], %35 {strides = array<i32>} : memref<32x1xf32, #tpu.memory_space<vmem>>, vector<32x1xf32>,
      %cst_28 = arith.constant 0.000000e+00 : f32
      %37 = vector.broadcast %cst_28 : f32 to vector<32x128xf32>
      %c0_29 = arith.constant 0 : index
      %c0_30 = arith.constant 0 : index
      %38 = vector.load %arg11[%c0_29, %c0_30] : memref<32x128xf32, #tpu.memory_space<vmem>>, vector<32x128xf32>
      tpu.vector_store %arg11[%c0_29, %c0_30], %37 {strides = array<i32>} : memref<32x128xf32, #tpu.memory_space<vmem>>, vector<32x128xf32>,
    } else {
    }
    %c0 = arith.constant 0 : index
    %c0_1 = arith.constant 0 : index
    %3 = vector.load %arg2[%c0, %c0_1] : memref<32x128xbf16, #tpu.memory_space<vmem>>, vector<32x128xbf16>
    %c0_2 = arith.constant 0 : index
    %c0_3 = arith.constant 0 : index
    %4 = vector.load %arg3[%c0_2, %c0_3] : memref<64x128xbf16, #tpu.memory_space<vmem>>, vector<64x128xbf16>
    %cst = arith.constant dense<0.000000e+00> : vector<32x64xf32>
    %5 = tpu.matmul %3, %4, %cst {dimension_numbers = #tpu.dot_dimension_numbers<[1], [1], [0], [0], [0, 0, 1, 0], [], []>} : vector<32x128xbf16>, vector<64x128xbf16>, vector<32x64xf32> -> vector<32x64xf32>
    %c0_4 = arith.constant 0 : index
    %c0_5 = arith.constant 0 : index
    %6 = vector.load %arg9[%c0_4, %c0_5] : memref<32x1xf32, #tpu.memory_space<vmem>>, vector<32x1xf32>
    %cst_6 = arith.constant dense<0xFF800000> : vector<32xf32>
    %7 = vector.multi_reduction <maximumf>, %5, %cst_6 [1] : vector<32x64xf32> to vector<32xf32>
    %8 = vector.shape_cast %7 : vector<32xf32> to vector<32x1xf32>
    %9 = arith.maximumf %6, %8 : vector<32x1xf32>
    %10 = arith.subf %6, %9 : vector<32x1xf32>
    %11 = math.exp %10 : vector<32x1xf32>
    %12 = vector.broadcast %9 : vector<32x1xf32> to vector<32x64xf32>
    %13 = arith.subf %5, %12 : vector<32x64xf32>
    %14 = math.exp %13 : vector<32x64xf32>
    %15 = arith.truncf %14 : vector<32x64xf32> to vector<32x64xbf16>
    %c0_7 = arith.constant 0 : index
    %c0_8 = arith.constant 0 : index
    %16 = vector.load %arg10[%c0_7, %c0_8] : memref<32x1xf32, #tpu.memory_space<vmem>>, vector<32x1xf32>
    %17 = arith.mulf %11, %16 : vector<32x1xf32>
    %cst_9 = arith.constant dense<0.000000e+00> : vector<32xf32>
    %18 = vector.multi_reduction <add>, %14, %cst_9 [1] : vector<32x64xf32> to vector<32xf32>
    %19 = vector.shape_cast %18 : vector<32xf32> to vector<32x1xf32>
    %20 = arith.addf %17, %19 : vector<32x1xf32>
    %c0_10 = arith.constant 0 : index
    %c0_11 = arith.constant 0 : index
    %21 = vector.load %arg10[%c0_10, %c0_11] : memref<32x1xf32, #tpu.memory_space<vmem>>, vector<32x1xf32>
    tpu.vector_store %arg10[%c0_10, %c0_11], %20 {strides = array<i32>} : memref<32x1xf32, #tpu.memory_space<vmem>>, vector<32x1xf32>,
    %c0_12 = arith.constant 0 : index
    %c0_13 = arith.constant 0 : index
    %22 = vector.load %arg11[%c0_12, %c0_13] : memref<32x128xf32, #tpu.memory_space<vmem>>, vector<32x128xf32>
    %23 = vector.broadcast %11 : vector<32x1xf32> to vector<32x128xf32>
    %24 = arith.mulf %23, %22 : vector<32x128xf32>
    %c0_14 = arith.constant 0 : index
    %c0_15 = arith.constant 0 : index
    %25 = vector.load %arg4[%c0_14, %c0_15] : memref<64x128xbf16, #tpu.memory_space<vmem>>, vector<64x128xbf16>
    %cst_16 = arith.constant dense<0.000000e+00> : vector<32x128xf32>
    %26 = tpu.matmul %15, %25, %cst_16 {dimension_numbers = #tpu.dot_dimension_numbers<[1], [0], [0], [1], [0, 0, 1, 1], [], []>} : vector<32x64xbf16>, vector<64x128xbf16>, vector<32x128xf32> -> vector<32x128xf32>
    %27 = arith.addf %24, %26 : vector<32x128xf32>
    %c0_17 = arith.constant 0 : index
    %c0_18 = arith.constant 0 : index
    %28 = vector.load %arg11[%c0_17, %c0_18] : memref<32x128xf32, #tpu.memory_space<vmem>>, vector<32x128xf32>
    tpu.vector_store %arg11[%c0_17, %c0_18], %27 {strides = array<i32>} : memref<32x128xf32, #tpu.memory_space<vmem>>, vector<32x128xf32>,
    %c0_19 = arith.constant 0 : index
    %c0_20 = arith.constant 0 : index
    %29 = vector.load %arg9[%c0_19, %c0_20] : memref<32x1xf32, #tpu.memory_space<vmem>>, vector<32x1xf32>
    tpu.vector_store %arg9[%c0_19, %c0_20], %9 {strides = array<i32>} : memref<32x1xf32, #tpu.memory_space<vmem>>, vector<32x1xf32>,
    %c1_i32 = arith.constant 1 : i32
    %30 = arith.cmpi eq, %arg1, %c1_i32 : i32
    %31 = arith.extui %30 : i1 to i32
    %c0_i32_21 = arith.constant 0 : i32
    %32 = arith.cmpi ne, %31, %c0_i32_21 : i32
    scf.if %32 {
      %c0_22 = arith.constant 0 : index
      %c0_23 = arith.constant 0 : index
      %33 = memref.load %arg6[%c0_22, %c0_23] : memref<1x1xf32, #tpu.memory_space<smem>>
      %c0_24 = arith.constant 0 : index
      %c0_25 = arith.constant 0 : index
      %34 = memref.load %arg7[%c0_24, %c0_25] : memref<1x1xf32, #tpu.memory_space<smem>>
      %c0_26 = arith.constant 0 : index
      %c0_27 = arith.constant 0 : index
      %35 = vector.load %arg11[%c0_26, %c0_27] : memref<32x128xf32, #tpu.memory_space<vmem>>, vector<32x128xf32>
      %c0_28 = arith.constant 0 : index
      %c0_29 = arith.constant 0 : index
      %36 = vector.load %arg10[%c0_28, %c0_29] : memref<32x1xf32, #tpu.memory_space<vmem>>, vector<32x1xf32>
      %37 = tpu.reciprocal %36 {approx = true} : vector<32x1xf32> -> vector<32x1xf32>
      %38 = vector.broadcast %37 : vector<32x1xf32> to vector<32x128xf32>
      %39 = arith.mulf %35, %38 : vector<32x128xf32>
      %40 = vector.broadcast %33 : f32 to vector<32x128xf32>
      %41 = arith.mulf %40, %39 : vector<32x128xf32>
      %c0_30 = arith.constant 0 : index
      %c0_31 = arith.constant 0 : index
      %42 = vector.load %arg5[%c0_30, %c0_31] : memref<32x128xf32, #tpu.memory_space<vmem>>, vector<32x128xf32>
      %43 = vector.broadcast %34 : f32 to vector<32x128xf32>
      %44 = arith.mulf %43, %42 : vector<32x128xf32>
      %45 = arith.addf %41, %44 : vector<32x128xf32>
      %c0_32 = arith.constant 0 : index
      %c0_33 = arith.constant 0 : index
      %46 = vector.load %arg8[%c0_32, %c0_33] : memref<32x128xf32, #tpu.memory_space<vmem>>, vector<32x128xf32>
      tpu.vector_store %arg8[%c0_32, %c0_33], %45 {strides = array<i32>} : memref<32x128xf32, #tpu.memory_space<vmem>>, vector<32x128xf32>,
    } else {
    }
    return
  }
  func.func @transform_0(%arg0: i32, %arg1: i32) -> (i32, i32) {
    %c0_i32 = arith.constant 0 : i32
    %c0_i32_0 = arith.constant 0 : i32
    return %arg0, %c0_i32 : i32, i32
  }
  func.func @transform_1(%arg0: i32, %arg1: i32) -> (i32, i32) {
    %c0_i32 = arith.constant 0 : i32
    %c0_i32_0 = arith.constant 0 : i32
    return %arg1, %c0_i32 : i32, i32
  }
  func.func @transform_2(%arg0: i32, %arg1: i32) -> (i32, i32) {
    %c0_i32 = arith.constant 0 : i32
    %c0_i32_0 = arith.constant 0 : i32
    return %arg1, %c0_i32 : i32, i32
  }
  func.func @transform_3(%arg0: i32, %arg1: i32) -> (i32, i32) {
    %c0_i32 = arith.constant 0 : i32
    %c0_i32_0 = arith.constant 0 : i32
    return %arg0, %c0_i32 : i32, i32
  }
  func.func @transform_4(%arg0: i32, %arg1: i32) -> (i32, i32) {
    %c0_i32 = arith.constant 0 : i32
    %c0_i32_0 = arith.constant 0 : i32
    %c0_i32_1 = arith.constant 0 : i32
    return %c0_i32, %c0_i32_0 : i32, i32
  }
  func.func @transform_5(%arg0: i32, %arg1: i32) -> (i32, i32) {
    %c0_i32 = arith.constant 0 : i32
    %c0_i32_0 = arith.constant 0 : i32
    %c0_i32_1 = arith.constant 0 : i32
    return %c0_i32, %c0_i32_0 : i32, i32
  }
  func.func @transform_6(%arg0: i32, %arg1: i32) -> (i32, i32) {
    %c0_i32 = arith.constant 0 : i32
    %c0_i32_0 = arith.constant 0 : i32
    return %arg0, %c0_i32 : i32, i32
  }
}

</mosaic_0001>

<llo_original>
// kernel: tpu_custom_call.1
$region0: #{tpu_custom_call.1}
  #allocation0 [shape = 'u32[]', space=smem, size = 0x4, offset = 0x4, fixed_abs, tag = 'smem constant byte address 0x4 - core index']
  #allocation1 [shape = 'u32[144,128]{1,0:T(1,128)}', space=vmem, size = 0x12000, scoped, tag = 'internal scratch']
  #allocation2 [shape = 'f32[32,1]{1,0:T(8,128)}', space=vmem, size = 0x4000, scoped, tag = 'scratch operand']
  #allocation3 [shape = 'f32[32,1]{1,0:T(8,128)}', space=vmem, size = 0x4000, scoped, tag = 'scratch operand']
  #allocation4 [shape = 'f32[32,128]{1,0:T(8,128)}', space=vmem, size = 0x4000, scoped, tag = 'scratch operand']
  #allocation5 [shape = 'f32[1,1]{1,0:T(1,128)S(6)}', space=smem, size = 0x200, scoped, tag = 'scoped memory for tpu_custom_call.1']
  #allocation6 [shape = 'f32[1,1]{1,0:T(1,128)S(6)}', space=smem, size = 0x200, scoped, tag = 'scoped memory for tpu_custom_call.1']
  %s0 = inlined_call_operand.hbm [shape: bf16[64,128], index: 0, kind: input, shape index: {}]
  %s1 = inlined_call_operand.hbm [shape: bf16[128,128], index: 1, kind: input, shape index: {}]
  %s2 = inlined_call_operand.hbm [shape: bf16[128,128], index: 2, kind: input, shape index: {}]
  %s3 = inlined_call_operand.hbm [shape: f32[64,128], index: 3, kind: input, shape index: {}]
  %s4 = inlined_call_operand.<no memory space> [shape: f32[1,1], index: 4, kind: input, shape index: {}]
  %s5 = inlined_call_operand.<no memory space> [shape: f32[1,1], index: 5, kind: input, shape index: {}]
  %s6 = inlined_call_operand.hbm [shape: f32[64,128], index: 6, kind: output, shape index: {}]
  %s7 = sld [smem:[#allocation0]]
  $region81: #{tpu_custom_call.1} parent=0
    _
  %s9 = ssub.s32 1, %s7
  %s10 = scalar_select 0, %s9, %s7
  %11 = sst [smem:[#allocation5]] %s4
  %12 = sst [smem:[#allocation6]] %s5
  $region1: #{tpu_custom_call.1} parent=0
    #allocation7 [shape = 'u8[16384]{0}', space=vmem, size = 0x4000, scoped, tag = 'input window, operand 0']
    #allocation8 [shape = 's32[2]{0}', space=sflag, size = 0x8, scoped, tag = 'scoped memory for tpu_custom_call.1']
    #allocation9 [shape = 's32[2]{0}', space=sflag, size = 0x8, scoped, tag = 'scoped memory for tpu_custom_call.1']
    #allocation10 [shape = 'u8[32768]{0}', space=vmem, size = 0x8000, scoped, tag = 'input window, operand 1']
    #allocation11 [shape = 's32[2]{0}', space=sflag, size = 0x8, scoped, tag = 'scoped memory for tpu_custom_call.1']
    #allocation12 [shape = 'u8[32768]{0}', space=vmem, size = 0x8000, scoped, tag = 'input window, operand 2']
    #allocation13 [shape = 'u8[32768]{0}', space=vmem, size = 0x8000, scoped, tag = 'input window, operand 3']
    #allocation14 [shape = 's32[2]{0}', space=sflag, size = 0x8, scoped, tag = 'scoped memory for tpu_custom_call.1']
    #allocation15 [shape = 'u8[32768]{0}', space=vmem, size = 0x8000, scoped, tag = 'output window, operand 0']
    %13 = vsyncpa [#allocation8], 0
    %s14 = scalar_lea.sflag [#allocation8], 1
    %15 = vsyncpa %s14, 0
    %16 = vsyncpa [#allocation11], 0
    %s17 = scalar_lea.sflag [#allocation11], 1
    %18 = vsyncpa %s17, 0
    %19 = vsyncpa [#allocation14], 0
    %s20 = scalar_lea.sflag [#allocation14], 1
    %21 = vsyncpa %s20, 0
    %22 = vsyncpa [#allocation9], 0
    %s23 = scalar_lea.sflag [#allocation9], 1
    %24 = vsyncpa %s23, 0
    loop: start=0, step=1, limit=6
    $region2: #{tpu_custom_call.1} parent=1 // loop_pre_header
      _
    $region3: #{tpu_custom_call.1} parent=1 // loop_header
      %s26 = sphi 0, %s30
      %p27 = scmp.ge.s32.totalorder %s26, 6
      %s33 = sphi 0, %s45
      %s34 = sphi 0, %s41
      %s35 = sphi 0, %s33
      %s36 = sphi 0, %s34
      %s37 = sphi 0, %s35
      %s38 = sphi 0, %s36
      %s48 = sphi 0, %s50
      %s51 = sphi 0, %s48
      %s52 = sphi 0, %s51
      %s68 = sphi 0, %s52
      %s74 = sphi 0, %s76
      %s77 = sphi 0, %s74
      %s78 = sphi 0, %s77
      %s94 = sphi 0, %s78
      %s100 = sphi 0, %s102
      %s103 = sphi 0, %s100
      %s104 = sphi 0, %s103
      %s120 = sphi 0, %s104
      %s126 = sphi 0, %s128
      %s129 = sphi 0, %s126
      %s130 = sphi 0, %s129
      %s146 = sphi 0, %s130
      %s150 = sphi 0, %s150
      %s152 = sphi 0, %s150
      %s153 = sphi 0, %s152
      %s167 = sphi 0, %s153
      %s171 = sphi 0, %s171
      %s173 = sphi 0, %s171
      %s174 = sphi 0, %s173
      %s188 = sphi 0, %s174
      %s194 = sphi 0, %s196
      %s197 = sphi 0, %s194
      %s198 = sphi 0, %s197
      %s214 = sphi 0, %s198
    $region4: #{tpu_custom_call.1} parent=1 // loop_header_branch
      %29 = sbr.rel (%p27) target = $region8
    $region5: #{tpu_custom_call.1} parent=1 // loop_body
      %s31 = ssub.s32 %s26, 1
      %s32 = ssub.s32 %s26, 2
      %s39 = sadd.s32 1, %s34
      %p40 = scmp.ge.s32.totalorder %s39, 2
      %s41 = scalar_select %p40, 0, %s39
      %s42 = sadd.s32 1, %s33
      %s43 = scalar_select %p40, %s42, %s33
      %p44 = scmp.ge.s32.totalorder %s43, 2
      %s45 = scalar_select %p44, 0, %s43
      %s46 = ssub.s32 %s33, %s45
      %p47 = scmp.eq.s32.totalorder %s46, 0
      %s49 = sadd.s32 %s48, 1
      %s50 = scalar_select %p47, %s48, %s49
      %p53 = pneg %p47
      %p54 = scmp.eq.s32.totalorder %s26, 3
      %p55 = por %p53, %p54
      %p56 = scmp.ne.s32.totalorder %s48, %s51
      %p57 = scmp.eq.s32.totalorder %s26, 0
      %p58 = por %p56, %p57
      %p59 = scmp.ne.s32.totalorder %s48, %s51
      %p60 = scmp.eq.s32.totalorder %s31, 3
      %p61 = por %p59, %p60
      %p62 = scmp.ne.s32.totalorder %s51, %s52
      %p63 = scmp.eq.s32.totalorder %s31, 0
      %p64 = por %p62, %p63
      %p65 = scmp.ne.s32.totalorder %s51, %s52
      %p66 = scmp.eq.s32.totalorder %s32, 3
      %p67 = por %p65, %p66
      %p69 = scmp.ne.s32.totalorder %s52, %s68
      %p70 = scmp.eq.s32.totalorder %s32, 0
      %p71 = por %p69, %p70
      %s72 = ssub.s32 %s34, %s41
      %p73 = scmp.eq.s32.totalorder %s72, 0
      %s75 = sadd.s32 %s74, 1
      %s76 = scalar_select %p73, %s74, %s75
      %p79 = pneg %p73
      %p80 = scmp.eq.s32.totalorder %s26, 3
      %p81 = por %p79, %p80
      %p82 = scmp.ne.s32.totalorder %s74, %s77
      %p83 = scmp.eq.s32.totalorder %s26, 0
      %p84 = por %p82, %p83
      %p85 = scmp.ne.s32.totalorder %s74, %s77
      %p86 = scmp.eq.s32.totalorder %s31, 3
      %p87 = por %p85, %p86
      %p88 = scmp.ne.s32.totalorder %s77, %s78
      %p89 = scmp.eq.s32.totalorder %s31, 0
      %p90 = por %p88, %p89
      %p91 = scmp.ne.s32.totalorder %s77, %s78
      %p92 = scmp.eq.s32.totalorder %s32, 3
      %p93 = por %p91, %p92
      %p95 = scmp.ne.s32.totalorder %s78, %s94
      %p96 = scmp.eq.s32.totalorder %s32, 0
      %p97 = por %p95, %p96
      %s98 = ssub.s32 %s34, %s41
      %p99 = scmp.eq.s32.totalorder %s98, 0
      %s101 = sadd.s32 %s100, 1
      %s102 = scalar_select %p99, %s100, %s101
      %p105 = pneg %p99
      %p106 = scmp.eq.s32.totalorder %s26, 3
      %p107 = por %p105, %p106
      %p108 = scmp.ne.s32.totalorder %s100, %s103
      %p109 = scmp.eq.s32.totalorder %s26, 0
      %p110 = por %p108, %p109
      %p111 = scmp.ne.s32.totalorder %s100, %s103
      %p112 = scmp.eq.s32.totalorder %s31, 3
      %p113 = por %p111, %p112
      %p114 = scmp.ne.s32.totalorder %s103, %s104
      %p115 = scmp.eq.s32.totalorder %s31, 0
      %p116 = por %p114, %p115
      %p117 = scmp.ne.s32.totalorder %s103, %s104
      %p118 = scmp.eq.s32.totalorder %s32, 3
      %p119 = por %p117, %p118
      %p121 = scmp.ne.s32.totalorder %s104, %s120
      %p122 = scmp.eq.s32.totalorder %s32, 0
      %p123 = por %p121, %p122
      %s124 = ssub.s32 %s33, %s45
      %p125 = scmp.eq.s32.totalorder %s124, 0
      %s127 = sadd.s32 %s126, 1
      %s128 = scalar_select %p125, %s126, %s127
      %p131 = pneg %p125
      %p132 = scmp.eq.s32.totalorder %s26, 3
      %p133 = por %p131, %p132
      %p134 = scmp.ne.s32.totalorder %s126, %s129
      %p135 = scmp.eq.s32.totalorder %s26, 0
      %p136 = por %p134, %p135
      %p137 = scmp.ne.s32.totalorder %s126, %s129
      %p138 = scmp.eq.s32.totalorder %s31, 3
      %p139 = por %p137, %p138
      %p140 = scmp.ne.s32.totalorder %s129, %s130
      %p141 = scmp.eq.s32.totalorder %s31, 0
      %p142 = por %p140, %p141
      %p143 = scmp.ne.s32.totalorder %s129, %s130
      %p144 = scmp.eq.s32.totalorder %s32, 3
      %p145 = por %p143, %p144
      %p147 = scmp.ne.s32.totalorder %s130, %s146
      %p148 = scmp.eq.s32.totalorder %s32, 0
      %p149 = por %p147, %p148
      %s151 = sadd.s32 %s150, 1
      %p154 = scmp.eq.s32.totalorder %s26, 3
      %p155 = scmp.ne.s32.totalorder %s150, %s152
      %p156 = scmp.eq.s32.totalorder %s26, 0
      %p157 = por %p155, %p156
      %p158 = scmp.ne.s32.totalorder %s150, %s152
      %p159 = scmp.eq.s32.totalorder %s31, 3
      %p160 = por %p158, %p159
      %p161 = scmp.ne.s32.totalorder %s152, %s153
      %p162 = scmp.eq.s32.totalorder %s31, 0
      %p163 = por %p161, %p162
      %p164 = scmp.ne.s32.totalorder %s152, %s153
      %p165 = scmp.eq.s32.totalorder %s32, 3
      %p166 = por %p164, %p165
      %p168 = scmp.ne.s32.totalorder %s153, %s167
      %p169 = scmp.eq.s32.totalorder %s32, 0
      %p170 = por %p168, %p169
      %s172 = sadd.s32 %s171, 1
      %p175 = scmp.eq.s32.totalorder %s26, 3
      %p176 = scmp.ne.s32.totalorder %s171, %s173
      %p177 = scmp.eq.s32.totalorder %s26, 0
      %p178 = por %p176, %p177
      %p179 = scmp.ne.s32.totalorder %s171, %s173
      %p180 = scmp.eq.s32.totalorder %s31, 3
      %p181 = por %p179, %p180
      %p182 = scmp.ne.s32.totalorder %s173, %s174
      %p183 = scmp.eq.s32.totalorder %s31, 0
      %p184 = por %p182, %p183
      %p185 = scmp.ne.s32.totalorder %s173, %s174
      %p186 = scmp.eq.s32.totalorder %s32, 3
      %p187 = por %p185, %p186
      %p189 = scmp.ne.s32.totalorder %s174, %s188
      %p190 = scmp.eq.s32.totalorder %s32, 0
      %p191 = por %p189, %p190
      %s192 = ssub.s32 %s33, %s45
      %p193 = scmp.eq.s32.totalorder %s192, 0
      %s195 = sadd.s32 %s194, 1
      %s196 = scalar_select %p193, %s194, %s195
      %p199 = pneg %p193
      %p200 = scmp.eq.s32.totalorder %s26, 3
      %p201 = por %p199, %p200
      %p202 = scmp.ne.s32.totalorder %s194, %s197
      %p203 = scmp.eq.s32.totalorder %s26, 0
      %p204 = por %p202, %p203
      %p205 = scmp.ne.s32.totalorder %s194, %s197
      %p206 = scmp.eq.s32.totalorder %s31, 3
      %p207 = por %p205, %p206
      %p208 = scmp.ne.s32.totalorder %s197, %s198
      %p209 = scmp.eq.s32.totalorder %s31, 0
      %p210 = por %p208, %p209
      %p211 = scmp.ne.s32.totalorder %s197, %s198
      %p212 = scmp.eq.s32.totalorder %s32, 3
      %p213 = por %p211, %p212
      %p215 = scmp.ne.s32.totalorder %s198, %s214
      %p216 = scmp.eq.s32.totalorder %s32, 0
      %p217 = por %p215, %p216
      %p218 = scmp.le.s32.totalorder 1, %s26
      %p219 = scmp.lt.s32.totalorder %s26, 5
      %p220 = pnand %p218, %p219
      %p221 = pneg %p220
      // Predicated region
      $region9: #{tpu_custom_call.1} parent=5 // pred_check
        _
      $region10: #{tpu_custom_call.1} parent=5 // pred_check_branch
        %223 = sbr.rel (%p220) target = $region12
      $region11: #{tpu_custom_call.1} parent=5 // pred_region
        %s224 = ssub.s32 %s26, 1
        // Predicated region
        $region13: #{tpu_custom_call.1} parent=11 // pred_check
          %p225 = pneg %p163
        $region14: #{tpu_custom_call.1} parent=11 // pred_check_branch
          %227 = sbr.rel (%p225) target = $region16
        $region15: #{tpu_custom_call.1} parent=11 // pred_region
          _
        $region16: #{tpu_custom_call.1} parent=11 // pred_fallthru
          _
        // Predicated region
        $region17: #{tpu_custom_call.1} parent=11 // pred_check
          %p228 = pneg %p184
        $region18: #{tpu_custom_call.1} parent=11 // pred_check_branch
          %230 = sbr.rel (%p228) target = $region20
        $region19: #{tpu_custom_call.1} parent=11 // pred_region
          _
        $region20: #{tpu_custom_call.1} parent=11 // pred_fallthru
          _
      $region12: #{tpu_custom_call.1} parent=5 // pred_fallthru
        _
      %p231 = scmp.lt.s32.totalorder %s26, 4
      // Predicated region
      $region21: #{tpu_custom_call.1} parent=5 // pred_check
        %p232 = pneg %p231
      $region22: #{tpu_custom_call.1} parent=5 // pred_check_branch
        %234 = sbr.rel (%p232) target = $region24
      $region23: #{tpu_custom_call.1} parent=5 // pred_region
        // Predicated region
        $region25: #{tpu_custom_call.1} parent=23 // pred_check
          %p235 = pneg %p58
        $region26: #{tpu_custom_call.1} parent=23 // pred_check_branch
          %237 = sbr.rel (%p235) target = $region28
        $region27: #{tpu_custom_call.1} parent=23 // pred_region
          %s238 = sand.u32 %s48, 1
          %s239 = scalar_lea.sflag [#allocation8], %s238
          %s240 = sand.u32 %s48, 1
          %s241 = smul.addr %s240, 16
          %s242 = scalar_lea.vmem [#allocation7], %s241
          %s243 = smul.u32 4, %s33
          %s245 = ssub.s32 256, 256
          %246 = vsyncadd %s239, %s245
          %s247 = smul.addr %s243, 64
          %s248 = scalar_lea.hbm %s0, %s247
          %s249 = sshll.u32 %s242, 4
          %s250 = int_to_ptr.vmem [resolvable:$true] %s249
          %255 = dma.hbm_to_vmem [thread:$0]  %s248, 256, %s250, %s239, 64, 64, 4
        $region28: #{tpu_custom_call.1} parent=23 // pred_fallthru
          _
        // Predicated region
        $region29: #{tpu_custom_call.1} parent=23 // pred_check
          %p256 = pneg %p84
        $region30: #{tpu_custom_call.1} parent=23 // pred_check_branch
          %258 = sbr.rel (%p256) target = $region32
        $region31: #{tpu_custom_call.1} parent=23 // pred_region
          %s259 = sand.u32 %s26, 1
          %s260 = scalar_lea.sflag [#allocation11], %s259
          %s261 = sand.u32 %s74, 1
          %s262 = smul.addr %s261, 32
          %s263 = scalar_lea.vmem [#allocation10], %s262
          %s264 = smul.u32 8, %s34
          %s266 = ssub.s32 512, 512
          %267 = vsyncadd %s260, %s266
          %s268 = smul.addr %s264, 64
          %s269 = scalar_lea.hbm %s1, %s268
          %s270 = sshll.u32 %s263, 4
          %s271 = int_to_ptr.vmem [resolvable:$true] %s270
          %276 = dma.hbm_to_vmem [thread:$0]  %s269, 512, %s271, %s260, 64, 64, 4
        $region32: #{tpu_custom_call.1} parent=23 // pred_fallthru
          _
        // Predicated region
        $region33: #{tpu_custom_call.1} parent=23 // pred_check
          %p277 = pneg %p110
        $region34: #{tpu_custom_call.1} parent=23 // pred_check_branch
          %279 = sbr.rel (%p277) target = $region36
        $region35: #{tpu_custom_call.1} parent=23 // pred_region
          %s280 = sand.u32 %s26, 1
          %s281 = scalar_lea.sflag [#allocation11], %s280
          %s282 = sand.u32 %s100, 1
          %s283 = smul.addr %s282, 32
          %s284 = scalar_lea.vmem [#allocation12], %s283
          %s285 = smul.u32 8, %s34
          %s287 = ssub.s32 512, 512
          %288 = vsyncadd %s281, %s287
          %s289 = smul.addr %s285, 64
          %s290 = scalar_lea.hbm %s2, %s289
          %s291 = sshll.u32 %s284, 4
          %s292 = int_to_ptr.vmem [resolvable:$true] %s291
          %297 = dma.hbm_to_vmem [thread:$0]  %s290, 512, %s292, %s281, 64, 64, 4
        $region36: #{tpu_custom_call.1} parent=23 // pred_fallthru
          _
        // Predicated region
        $region37: #{tpu_custom_call.1} parent=23 // pred_check
          %p298 = pneg %p136
        $region38: #{tpu_custom_call.1} parent=23 // pred_check_branch
          %300 = sbr.rel (%p298) target = $region40
        $region39: #{tpu_custom_call.1} parent=23 // pred_region
          %s301 = sand.u32 %s126, 1
          %s302 = scalar_lea.sflag [#allocation14], %s301
          %s303 = sand.u32 %s126, 1
          %s304 = smul.addr %s303, 32
          %s305 = scalar_lea.vmem [#allocation13], %s304
          %s306 = smul.u32 4, %s33
          %s308 = ssub.s32 512, 512
          %309 = vsyncadd %s302, %s308
          %s310 = smul.addr %s306, 128
          %s311 = scalar_lea.hbm %s3, %s310
          %s312 = sshll.u32 %s305, 4
          %s313 = int_to_ptr.vmem [resolvable:$true] %s312
          %318 = dma.hbm_to_vmem [thread:$0]  %s311, 512, %s313, %s302, 128, 128, 8
        $region40: #{tpu_custom_call.1} parent=23 // pred_fallthru
          _
      $region24: #{tpu_custom_call.1} parent=5 // pred_fallthru
        _
      %p319 = scmp.le.s32.totalorder 1, %s26
      %p320 = scmp.lt.s32.totalorder %s26, 5
      %p321 = pnand %p319, %p320
      %p322 = pneg %p321
      // Predicated region
      $region41: #{tpu_custom_call.1} parent=5 // pred_check
        _
      $region42: #{tpu_custom_call.1} parent=5 // pred_check_branch
        %324 = sbr.rel (%p321) target = $region44
      $region43: #{tpu_custom_call.1} parent=5 // pred_region
        %s325 = ssub.s32 %s26, 1
        %s326 = sand.u32 %s51, 1
        %s327 = scalar_lea.sflag [#allocation8], %s326
        %s328 = sand.u32 %s51, 1
        %s329 = smul.addr %s328, 16
        %s330 = scalar_lea.vmem [#allocation7], %s329
        // Predicated region
        $region45: #{tpu_custom_call.1} parent=43 // pred_check
          %p331 = pneg %p64
        $region46: #{tpu_custom_call.1} parent=43 // pred_check_branch
          %333 = sbr.rel (%p331) target = $region48
        $region47: #{tpu_custom_call.1} parent=43 // pred_region
          %334 = dma.done %s327, 256
        $region48: #{tpu_custom_call.1} parent=43 // pred_fallthru
          _
        %s335 = sand.u32 %s31, 1
        %s336 = scalar_lea.sflag [#allocation11], %s335
        %s337 = sand.u32 %s77, 1
        %s338 = smul.addr %s337, 32
        %s339 = scalar_lea.vmem [#allocation10], %s338
        // Predicated region
        $region49: #{tpu_custom_call.1} parent=43 // pred_check
          %p340 = pneg %p90
        $region50: #{tpu_custom_call.1} parent=43 // pred_check_branch
          %342 = sbr.rel (%p340) target = $region52
        $region51: #{tpu_custom_call.1} parent=43 // pred_region
          %343 = dma.done %s336, 512
        $region52: #{tpu_custom_call.1} parent=43 // pred_fallthru
          _
        %s344 = sand.u32 %s31, 1
        %s345 = scalar_lea.sflag [#allocation11], %s344
        %s346 = sand.u32 %s103, 1
        %s347 = smul.addr %s346, 32
        %s348 = scalar_lea.vmem [#allocation12], %s347
        // Predicated region
        $region53: #{tpu_custom_call.1} parent=43 // pred_check
          %p349 = pneg %p116
        $region54: #{tpu_custom_call.1} parent=43 // pred_check_branch
          %351 = sbr.rel (%p349) target = $region56
        $region55: #{tpu_custom_call.1} parent=43 // pred_region
          %352 = dma.done %s345, 512
        $region56: #{tpu_custom_call.1} parent=43 // pred_fallthru
          _
        %s353 = sand.u32 %s129, 1
        %s354 = scalar_lea.sflag [#allocation14], %s353
        %s355 = sand.u32 %s129, 1
        %s356 = smul.addr %s355, 32
        %s357 = scalar_lea.vmem [#allocation13], %s356
        // Predicated region
        $region57: #{tpu_custom_call.1} parent=43 // pred_check
          %p358 = pneg %p142
        $region58: #{tpu_custom_call.1} parent=43 // pred_check_branch
          %360 = sbr.rel (%p358) target = $region60
        $region59: #{tpu_custom_call.1} parent=43 // pred_region
          %361 = dma.done %s354, 512
        $region60: #{tpu_custom_call.1} parent=43 // pred_fallthru
          _
        %s362 = sand.u32 %s51, 1
        %s363 = scalar_lea.sflag [#allocation8], %s362
        %s364 = sand.u32 %s51, 1
        %s365 = smul.addr %s364, 16
        %s366 = scalar_lea.vmem [#allocation7], %s365
        %p367 = pneg %p64
        %p368 = pneg %p61
        %s369 = sand.u32 %s31, 1
        %s370 = scalar_lea.sflag [#allocation11], %s369
        %s371 = sand.u32 %s77, 1
        %s372 = smul.addr %s371, 32
        %s373 = scalar_lea.vmem [#allocation10], %s372
        %p374 = pneg %p90
        %p375 = pneg %p87
        %s376 = sand.u32 %s31, 1
        %s377 = scalar_lea.sflag [#allocation11], %s376
        %s378 = sand.u32 %s103, 1
        %s379 = smul.addr %s378, 32
        %s380 = scalar_lea.vmem [#allocation12], %s379
        %p381 = pneg %p116
        %p382 = pneg %p113
        %s383 = sand.u32 %s129, 1
        %s384 = scalar_lea.sflag [#allocation14], %s383
        %s385 = sand.u32 %s129, 1
        %s386 = smul.addr %s385, 32
        %s387 = scalar_lea.vmem [#allocation13], %s386
        %p388 = pneg %p142
        %p389 = pneg %p139
        %p390 = pneg %p163
        %p391 = pneg %p160
        %p392 = pneg %p184
        %p393 = pneg %p181
        %p394 = pneg %p210
        %p395 = pneg %p207
        %s396 = sand.u32 %s197, 1
        %s397 = scalar_lea.sflag [#allocation9], %s396
        %s398 = sand.u32 %s197, 1
        %s399 = smul.addr %s398, 32
        %s400 = scalar_lea.vmem [#allocation15], %s399
        %s401 = smul.u32 4, %s35
        %s402 = smul.u32 8, %s36
        %s403 = smul.u32 8, %s36
        %s404 = smul.u32 4, %s35
        %s405 = smul.u32 4, %s35
        %p407 = scmp.eq.s32.totalorder %s36, 0
        // Predicated region
        $region61: #{tpu_custom_call.1} parent=43 // pred_check
          %p408 = pneg %p407
        $region62: #{tpu_custom_call.1} parent=43 // pred_check_branch
          %410 = sbr.rel (%p408) target = $region64
        $region63: #{tpu_custom_call.1} parent=43 // pred_region
          %vm411 = vcmask 7168
          %412 = vst.msk [vmem:[#allocation2] sm:$0xff] %vm411, -inf
          %413 = vst.msk [vmem:[#allocation2 + $0x8] sm:$0xff] %vm411, -inf
          %414 = vst.msk [vmem:[#allocation2 + $0x10] sm:$0xff] %vm411, -inf
          %415 = vst.msk [vmem:[#allocation2 + $0x18] sm:$0xff] %vm411, -inf
          %416 = vst.msk [vmem:[#allocation3] sm:$0xff] %vm411, 0.0
          %417 = vst.msk [vmem:[#allocation3 + $0x8] sm:$0xff] %vm411, 0.0
          %418 = vst.msk [vmem:[#allocation3 + $0x10] sm:$0xff] %vm411, 0.0
          %419 = vst.msk [vmem:[#allocation3 + $0x18] sm:$0xff] %vm411, 0.0
          %420 = vst [vmem:[#allocation4] sm:$0xff] 0.0
          %421 = vst [vmem:[#allocation4 + $0x8] sm:$0xff] 0.0
          %422 = vst [vmem:[#allocation4 + $0x10] sm:$0xff] 0.0
          %423 = vst [vmem:[#allocation4 + $0x18] sm:$0xff] 0.0
        $region64: #{tpu_custom_call.1} parent=43 // pred_fallthru
          _
        %v424 = vld [vmem:[%s330] sm:$0xf]
        %v425 = vld [vmem:[%s330 + $0x4] sm:$0xf]
        %v426 = vld [vmem:[%s330 + $0x8] sm:$0xf]
        %v427 = vld [vmem:[%s330 + $0xc] sm:$0xf]
        %v428 = vld [vmem:[%s339] sm:$0xf]
        %v429 = vld [vmem:[%s339 + $0x4] sm:$0xf]
        %v430 = vld [vmem:[%s339 + $0x8] sm:$0xf]
        %v431 = vld [vmem:[%s339 + $0xc] sm:$0xf]
        %v432 = vld [vmem:[%s339 + $0x10] sm:$0xf]
        %v433 = vld [vmem:[%s339 + $0x14] sm:$0xf]
        %v434 = vld [vmem:[%s339 + $0x18] sm:$0xf]
        %v435 = vld [vmem:[%s339 + $0x1c] sm:$0xf]
        %v440 = vunpack.c.l.b16 %v424
        %v441 = vunpack.c.l.b16 %v425
        %v442 = vunpack.c.l.b16 %v426
        %v443 = vunpack.c.l.b16 %v427
        %v444 = vpack.c.b16 %v441, %v440
        %v445 = vpack.c.b16 %v443, %v442
        %v456 = vunpack.c.l.b16 %v428
        %v457 = vunpack.c.l.b16 %v429
        %v458 = vunpack.c.l.b16 %v430
        %v459 = vunpack.c.l.b16 %v431
        %v460 = vunpack.c.l.b16 %v432
        %v461 = vunpack.c.l.b16 %v433
        %v462 = vunpack.c.l.b16 %v434
        %v463 = vunpack.c.l.b16 %v435
        %v464 = vpack.c.b16 %v457, %v456
        %v465 = vpack.c.b16 %v459, %v458
        %v466 = vpack.c.b16 %v461, %v460
        %v467 = vpack.c.b16 %v463, %v462
        %472 = vmatprep.subr.bf16.mxu0 0
        %473 = vmatpush1.bf16.xpose.msra.mxu0 0
        %474 = vmatprep.subr.bf16.mxu0 0
        %475 = vmatpush1.bf16.xpose.msra.mxu0 0
        %476 = vmatprep.subr.bf16.mxu0 0
        %477 = vmatpush1.bf16.xpose.msra.mxu0 0
        %478 = vmatprep.subr.bf16.mxu0 0
        %479 = vmatpush1.bf16.xpose.msra.mxu0 0
        %480 = vmatprep.subr.bf16.mxu0 0
        %481 = vmatpush1.bf16.xpose.msra.mxu0 %v467
        %482 = vmatprep.subr.bf16.mxu0 0
        %483 = vmatpush1.bf16.xpose.msra.mxu0 %v466
        %484 = vmatprep.subr.bf16.mxu0 0
        %485 = vmatpush1.bf16.xpose.msra.mxu0 %v465
        %486 = vmatprep.subr.bf16.mxu0 0
        %487 = vmatpush1.bf16.xpose.msra.mxu0 %v464
        %488 = vmatprep.subr.bf16.mxu0 0
        %489 = vmatpush2.bf16.xpose.msra.mxu0 0
        %490 = vmatprep.subr.bf16.mxu0 0
        %491 = vmatpush2.bf16.xpose.msra.mxu0 0
        %492 = vmatprep.subr.bf16.mxu0 0
        %493 = vmatpush2.bf16.xpose.msra.mxu0 0
        %494 = vmatprep.subr.bf16.mxu0 0
        %495 = vmatpush2.bf16.xpose.msra.mxu0 0
        %496 = vmatprep.subr.bf16.mxu0 0
        %497 = vmatpush2.bf16.xpose.msra.mxu0 0
        %498 = vmatprep.subr.bf16.mxu0 0
        %499 = vmatpush2.bf16.xpose.msra.mxu0 0
        %500 = vmatprep.subr.bf16.mxu0 0
        %501 = vmatpush2.bf16.xpose.msra.mxu0 0
        %502 = vmatprep.subr.bf16.mxu0 0
        %503 = vmatpush2.bf16.xpose.msra.mxu0 0
        %504 = vmatprep.mubr.bf16.mxu0 0
        %505 = vmatmul.mubr.bf16.gmra.mxu0 %v444
        %v506 = vpop.f32.mrf.mxu0
        %v507 = vadd.f32 0.0, %v506
        %v508 = vpop.f32.mrf.mxu0
        %v509 = vpop.f32.mrf.mxu0
        %v510 = vadd.f32 0.0, %v509
        %v511 = vpop.f32.mrf.mxu0
        %512 = vmatprep.mubr.bf16.mxu0 0
        %513 = vmatmul.mubr.bf16.gmra.mxu0 %v445
        %v514 = vpop.f32.mrf.mxu0
        %v515 = vadd.f32 0.0, %v514
        %v516 = vpop.f32.mrf.mxu0
        %v517 = vpop.f32.mrf.mxu0
        %v518 = vadd.f32 0.0, %v517
        %v519 = vpop.f32.mrf.mxu0
        %520 = vdwg.mxu0
        %v521 = vld [vmem:[#allocation2] sm:$0xff]
        %v522 = vld [vmem:[#allocation2 + $0x8] sm:$0xff]
        %v523 = vld [vmem:[#allocation2 + $0x10] sm:$0xff]
        %v524 = vld [vmem:[#allocation2 + $0x18] sm:$0xff]
        %vm525 = vcmask 523264
        %v526 = vsel %vm525, %v507, -inf
        %527 = vmax.xlane.f32.xlu0 %v526
        %v528 = vpop.xlane.xlu0 %527
        %v529 = vsel %vm525, %v510, -inf
        %530 = vmax.xlane.f32.xlu0 %v529
        %v531 = vpop.xlane.xlu0 %530
        %v532 = vsel %vm525, %v515, -inf
        %533 = vmax.xlane.f32.xlu0 %v532
        %v534 = vpop.xlane.xlu0 %533
        %v535 = vsel %vm525, %v518, -inf
        %536 = vmax.xlane.f32.xlu0 %v535
        %v537 = vpop.xlane.xlu0 %536
        %v538 = vmax.f32 %v521, %v528
        %v539 = vmax.f32 %v522, %v531
        %v540 = vmax.f32 %v523, %v534
        %v541 = vmax.f32 %v524, %v537
        %v542 = vsub.f32 %v521, %v538
        %v543 = vsub.f32 %v522, %v539
        %v544 = vsub.f32 %v523, %v540
        %v545 = vsub.f32 %v524, %v541
        %v546 = vmul.f32 %v542, 1.442695
        %v547 = vpow.pop %v546
        %v548 = vmul.f32 %v543, 1.442695
        %v549 = vpow.pop %v548
        %v550 = vmul.f32 %v544, 1.442695
        %v551 = vpow.pop %v550
        %v552 = vmul.f32 %v545, 1.442695
        %v553 = vpow.pop %v552
        %555 = vset.pattern.permute.xlu0 0
        %556 = vperm.xlu0 %555, %v538
        %v557 = vpop.permute.xlu0 %556
        %560 = vset.pattern.permute.xlu0 0
        %561 = vperm.xlu0 %560, %v539
        %v562 = vpop.permute.xlu0 %561
        %565 = vset.pattern.permute.xlu0 0
        %566 = vperm.xlu0 %565, %v540
        %v567 = vpop.permute.xlu0 %566
        %570 = vset.pattern.permute.xlu0 0
        %571 = vperm.xlu0 %570, %v541
        %v572 = vpop.permute.xlu0 %571
        %v574 = vsub.f32 %v507, %v557
        %v575 = vsub.f32 %v510, %v562
        %v576 = vsub.f32 %v515, %v567
        %v577 = vsub.f32 %v518, %v572
        %v578 = vmul.f32 %v574, 1.442695
        %v579 = vpow.pop %v578
        %v580 = vmul.f32 %v575, 1.442695
        %v581 = vpow.pop %v580
        %v582 = vmul.f32 %v576, 1.442695
        %v583 = vpow.pop %v582
        %v584 = vmul.f32 %v577, 1.442695
        %v585 = vpow.pop %v584
        %v586 = vpack.c.bf16 %v581, %v579
        %v587 = vpack.c.bf16 %v585, %v583
        %v588 = vld [vmem:[#allocation3] sm:$0xff]
        %v589 = vld [vmem:[#allocation3 + $0x8] sm:$0xff]
        %v590 = vld [vmem:[#allocation3 + $0x10] sm:$0xff]
        %v591 = vld [vmem:[#allocation3 + $0x18] sm:$0xff]
        %v592 = vmul.f32 %v547, %v588
        %v593 = vmul.f32 %v549, %v589
        %v594 = vmul.f32 %v551, %v590
        %v595 = vmul.f32 %v553, %v591
        %v596 = vsel %vm525, %v579, 0.0
        %597 = vadd.xlane.f32.xlu0 %v596
        %v598 = vpop.xlane.xlu0 %597
        %v599 = vsel %vm525, %v581, 0.0
        %600 = vadd.xlane.f32.xlu0 %v599
        %v601 = vpop.xlane.xlu0 %600
        %v602 = vsel %vm525, %v583, 0.0
        %603 = vadd.xlane.f32.xlu0 %v602
        %v604 = vpop.xlane.xlu0 %603
        %v605 = vsel %vm525, %v585, 0.0
        %606 = vadd.xlane.f32.xlu0 %v605
        %v607 = vpop.xlane.xlu0 %606
        %v608 = vadd.f32 %v592, %v598
        %v609 = vadd.f32 %v593, %v601
        %v610 = vadd.f32 %v594, %v604
        %v611 = vadd.f32 %v595, %v607
        %vm612 = vcmask 7168
        %613 = vst.msk [vmem:[#allocation3] sm:$0xff] %vm612, %v608
        %614 = vst.msk [vmem:[#allocation3 + $0x8] sm:$0xff] %vm612, %v609
        %615 = vst.msk [vmem:[#allocation3 + $0x10] sm:$0xff] %vm612, %v610
        %616 = vst.msk [vmem:[#allocation3 + $0x18] sm:$0xff] %vm612, %v611
        %v617 = vld [vmem:[#allocation4] sm:$0xff]
        %v618 = vld [vmem:[#allocation4 + $0x8] sm:$0xff]
        %v619 = vld [vmem:[#allocation4 + $0x10] sm:$0xff]
        %v620 = vld [vmem:[#allocation4 + $0x18] sm:$0xff]
        %622 = vset.pattern.permute.xlu0 0
        %623 = vperm.xlu0 %622, %v547
        %v624 = vpop.permute.xlu0 %623
        %627 = vset.pattern.permute.xlu0 0
        %628 = vperm.xlu0 %627, %v549
        %v629 = vpop.permute.xlu0 %628
        %632 = vset.pattern.permute.xlu0 0
        %633 = vperm.xlu0 %632, %v551
        %v634 = vpop.permute.xlu0 %633
        %637 = vset.pattern.permute.xlu0 0
        %638 = vperm.xlu0 %637, %v553
        %v639 = vpop.permute.xlu0 %638
        %v641 = vmul.f32 %v624, %v617
        %v642 = vmul.f32 %v629, %v618
        %v643 = vmul.f32 %v634, %v619
        %v644 = vmul.f32 %v639, %v620
        %v645 = vld [vmem:[%s348] sm:$0xf]
        %v646 = vld [vmem:[%s348 + $0x4] sm:$0xf]
        %v647 = vld [vmem:[%s348 + $0x8] sm:$0xf]
        %v648 = vld [vmem:[%s348 + $0xc] sm:$0xf]
        %v649 = vld [vmem:[%s348 + $0x10] sm:$0xf]
        %v650 = vld [vmem:[%s348 + $0x14] sm:$0xf]
        %v651 = vld [vmem:[%s348 + $0x18] sm:$0xf]
        %v652 = vld [vmem:[%s348 + $0x1c] sm:$0xf]
        %v661 = vunpack.c.l.b16 %v645
        %v662 = vunpack.c.l.b16 %v646
        %v663 = vunpack.c.l.b16 %v647
        %v664 = vunpack.c.l.b16 %v648
        %v665 = vunpack.c.l.b16 %v649
        %v666 = vunpack.c.l.b16 %v650
        %v667 = vunpack.c.l.b16 %v651
        %v668 = vunpack.c.l.b16 %v652
        %v669 = vpack.c.b16 %v662, %v661
        %v670 = vpack.c.b16 %v664, %v663
        %v671 = vpack.c.b16 %v666, %v665
        %v672 = vpack.c.b16 %v668, %v667
        %v678 = vsel %vm525, %v586, 0
        %v681 = vsel %vm525, %v587, 0
        %683 = vmatprep.subr.bf16.mxu0 0
        %684 = vmatpush1.bf16.msra.mxu0 0
        %685 = vmatprep.subr.bf16.mxu0 0
        %686 = vmatpush1.bf16.msra.mxu0 0
        %687 = vmatprep.subr.bf16.mxu0 0
        %688 = vmatpush1.bf16.msra.mxu0 0
        %689 = vmatprep.subr.bf16.mxu0 0
        %690 = vmatpush1.bf16.msra.mxu0 0
        %691 = vmatprep.subr.bf16.mxu0 0
        %692 = vmatpush1.bf16.msra.mxu0 %v672
        %693 = vmatprep.subr.bf16.mxu0 0
        %694 = vmatpush1.bf16.msra.mxu0 %v671
        %695 = vmatprep.subr.bf16.mxu0 0
        %696 = vmatpush1.bf16.msra.mxu0 %v670
        %697 = vmatprep.subr.bf16.mxu0 0
        %698 = vmatpush1.bf16.msra.mxu0 %v669
        %699 = vmatprep.subr.bf16.mxu0 0
        %700 = vmatpush2.bf16.msra.mxu0 0
        %701 = vmatprep.subr.bf16.mxu0 0
        %702 = vmatpush2.bf16.msra.mxu0 0
        %703 = vmatprep.subr.bf16.mxu0 0
        %704 = vmatpush2.bf16.msra.mxu0 0
        %705 = vmatprep.subr.bf16.mxu0 0
        %706 = vmatpush2.bf16.msra.mxu0 0
        %707 = vmatprep.subr.bf16.mxu0 0
        %708 = vmatpush2.bf16.msra.mxu0 0
        %709 = vmatprep.subr.bf16.mxu0 0
        %710 = vmatpush2.bf16.msra.mxu0 0
        %711 = vmatprep.subr.bf16.mxu0 0
        %712 = vmatpush2.bf16.msra.mxu0 0
        %713 = vmatprep.subr.bf16.mxu0 0
        %714 = vmatpush2.bf16.msra.mxu0 0
        %715 = vmatprep.mubr.bf16.mxu0 0
        %716 = vmatmul.mubr.bf16.gmra.mxu0 %v678
        %v717 = vpop.f32.mrf.mxu0
        %v718 = vadd.f32 0.0, %v717
        %v719 = vpop.f32.mrf.mxu0
        %v720 = vpop.f32.mrf.mxu0
        %v721 = vadd.f32 0.0, %v720
        %v722 = vpop.f32.mrf.mxu0
        %723 = vmatprep.mubr.bf16.mxu0 0
        %724 = vmatmul.mubr.bf16.gmra.mxu0 %v681
        %v725 = vpop.f32.mrf.mxu0
        %v726 = vadd.f32 0.0, %v725
        %v727 = vpop.f32.mrf.mxu0
        %v728 = vpop.f32.mrf.mxu0
        %v729 = vadd.f32 0.0, %v728
        %v730 = vpop.f32.mrf.mxu0
        %731 = vdwg.mxu0
        %v732 = vadd.f32 %v641, %v718
        %v733 = vadd.f32 %v642, %v721
        %v734 = vadd.f32 %v643, %v726
        %v735 = vadd.f32 %v644, %v729
        %736 = vst [vmem:[#allocation4] sm:$0xff] %v732
        %737 = vst [vmem:[#allocation4 + $0x8] sm:$0xff] %v733
        %738 = vst [vmem:[#allocation4 + $0x10] sm:$0xff] %v734
        %739 = vst [vmem:[#allocation4 + $0x18] sm:$0xff] %v735
        %740 = vst.msk [vmem:[#allocation2] sm:$0xff] %vm612, %v538
        %741 = vst.msk [vmem:[#allocation2 + $0x8] sm:$0xff] %vm612, %v539
        %742 = vst.msk [vmem:[#allocation2 + $0x10] sm:$0xff] %vm612, %v540
        %743 = vst.msk [vmem:[#allocation2 + $0x18] sm:$0xff] %vm612, %v541
        %p744 = scmp.eq.s32.totalorder %s36, 1
        // Predicated region
        $region65: #{tpu_custom_call.1} parent=43 // pred_check
          %p745 = pneg %p744
        $region66: #{tpu_custom_call.1} parent=43 // pred_check_branch
          %747 = sbr.rel (%p745) target = $region68
        $region67: #{tpu_custom_call.1} parent=43 // pred_region
          %s748 = sld [smem:[#allocation5]]
          %s749 = sld [smem:[#allocation6]]
          %v750 = vld [vmem:[#allocation4] sm:$0xff]
          %v751 = vld [vmem:[#allocation4 + $0x8] sm:$0xff]
          %v752 = vld [vmem:[#allocation4 + $0x10] sm:$0xff]
          %v753 = vld [vmem:[#allocation4 + $0x18] sm:$0xff]
          %v754 = vld [vmem:[#allocation3] sm:$0xff]
          %v755 = vld [vmem:[#allocation3 + $0x8] sm:$0xff]
          %v756 = vld [vmem:[#allocation3 + $0x10] sm:$0xff]
          %v757 = vld [vmem:[#allocation3 + $0x18] sm:$0xff]
          %v758 = vrcp.pop %v754
          %v759 = vrcp.pop %v755
          %v760 = vrcp.pop %v756
          %v761 = vrcp.pop %v757
          %763 = vset.pattern.permute.xlu0 0
          %764 = vperm.xlu0 %763, %v758
          %v765 = vpop.permute.xlu0 %764
          %768 = vset.pattern.permute.xlu0 0
          %769 = vperm.xlu0 %768, %v759
          %v770 = vpop.permute.xlu0 %769
          %773 = vset.pattern.permute.xlu0 0
          %774 = vperm.xlu0 %773, %v760
          %v775 = vpop.permute.xlu0 %774
          %778 = vset.pattern.permute.xlu0 0
          %779 = vperm.xlu0 %778, %v761
          %v780 = vpop.permute.xlu0 %779
          %v782 = vmul.f32 %v750, %v765
          %v783 = vmul.f32 %v751, %v770
          %v784 = vmul.f32 %v752, %v775
          %v785 = vmul.f32 %v753, %v780
          %v786 = vstv %s748
          %v787 = vmul.f32 %v786, %v782
          %v788 = vmul.f32 %v786, %v783
          %v789 = vmul.f32 %v786, %v784
          %v790 = vmul.f32 %v786, %v785
          %v791 = vld [vmem:[%s357] sm:$0xff]
          %v792 = vld [vmem:[%s357 + $0x8] sm:$0xff]
          %v793 = vld [vmem:[%s357 + $0x10] sm:$0xff]
          %v794 = vld [vmem:[%s357 + $0x18] sm:$0xff]
          %v795 = vstv %s749
          %v796 = vmul.f32 %v795, %v791
          %v797 = vmul.f32 %v795, %v792
          %v798 = vmul.f32 %v795, %v793
          %v799 = vmul.f32 %v795, %v794
          %v800 = vadd.f32 %v787, %v796
          %v801 = vadd.f32 %v788, %v797
          %v802 = vadd.f32 %v789, %v798
          %v803 = vadd.f32 %v790, %v799
          %804 = vst [vmem:[%s400] sm:$0xff] %v800
          %805 = vst [vmem:[%s400 + $0x8] sm:$0xff] %v801
          %806 = vst [vmem:[%s400 + $0x10] sm:$0xff] %v802
          %807 = vst [vmem:[%s400 + $0x18] sm:$0xff] %v803
        $region68: #{tpu_custom_call.1} parent=43 // pred_fallthru
          _
        %s808 = sand.u32 %s197, 1
        %s809 = scalar_lea.sflag [#allocation9], %s808
        %s810 = sand.u32 %s197, 1
        %s811 = smul.addr %s810, 32
        %s812 = scalar_lea.vmem [#allocation15], %s811
        // Predicated region
        $region69: #{tpu_custom_call.1} parent=43 // pred_check
          %p813 = pneg %p207
        $region70: #{tpu_custom_call.1} parent=43 // pred_check_branch
          %815 = sbr.rel (%p813) target = $region72
        $region71: #{tpu_custom_call.1} parent=43 // pred_region
          %s816 = smul.u32 4, %s35
          %s818 = ssub.s32 512, 512
          %819 = vsyncadd %s809, %s818
          %s820 = smul.addr %s816, 128
          %s821 = scalar_lea.hbm %s6, %s820
          %s822 = sshll.u32 %s812, 4
          %s823 = int_to_ptr.vmem [resolvable:$true] %s822
          %828 = dma.vmem_to_hbm [thread:$0]  %s823, 512, %s821, %s809, 128, 128, 8
        $region72: #{tpu_custom_call.1} parent=43 // pred_fallthru
          _
      $region44: #{tpu_custom_call.1} parent=5 // pred_fallthru
        _
      %p829 = scmp.le.s32.totalorder 2, %s26
      // Predicated region
      $region73: #{tpu_custom_call.1} parent=5 // pred_check
        %p830 = pneg %p829
      $region74: #{tpu_custom_call.1} parent=5 // pred_check_branch
        %832 = sbr.rel (%p830) target = $region76
      $region75: #{tpu_custom_call.1} parent=5 // pred_region
        %s833 = ssub.s32 %s26, 2
        // Predicated region
        $region77: #{tpu_custom_call.1} parent=75 // pred_check
          %p834 = pneg %p213
        $region78: #{tpu_custom_call.1} parent=75 // pred_check_branch
          %836 = sbr.rel (%p834) target = $region80
        $region79: #{tpu_custom_call.1} parent=75 // pred_region
          %s837 = sand.u32 %s198, 1
          %s838 = scalar_lea.sflag [#allocation9], %s837
          %s839 = sand.u32 %s198, 1
          %s840 = smul.addr %s839, 32
          %s841 = scalar_lea.vmem [#allocation15], %s840
          %842 = dma.done %s838, 512
        $region80: #{tpu_custom_call.1} parent=75 // pred_fallthru
          _
      $region76: #{tpu_custom_call.1} parent=5 // pred_fallthru
        _
    $region6: #{tpu_custom_call.1} parent=1 // loop_footer
      %s30 = sadd.s32 1, %s26
    $region7: #{tpu_custom_call.1} parent=1 // loop_footer_branch
      %25 = sbr.rel target = $region3
    $region8: #{tpu_custom_call.1} parent=1 // loop_exit
      _
    %843 = vsyncpa [#allocation8], 1
    %s844 = scalar_lea.sflag [#allocation8], 1
    %845 = vsyncpa %s844, 1
    %846 = vsyncpa [#allocation11], 1
    %s847 = scalar_lea.sflag [#allocation11], 1
    %848 = vsyncpa %s847, 1
    %849 = vsyncpa [#allocation14], 1
    %s850 = scalar_lea.sflag [#allocation14], 1
    %851 = vsyncpa %s850, 1
    %852 = vsyncpa [#allocation9], 1
    %s853 = scalar_lea.sflag [#allocation9], 1
    %854 = vsyncpa %s853, 1

</llo_original>
